<compile_context>
chip_gen: v7x
topology: tpu7x:2x2x1
jax: 0.10.0
libtpu: 0.0.40
codegen_flags: <defaults>
</compile_context>

<pallas_src>
import functools

import jax
import jax.numpy as jnp
from jax.experimental import pallas as pl
from jax.experimental.pallas import tpu as pltpu


def _round_up(x, m):
    return ((x + m - 1) // m) * m


def _vmem_capacity_bytes():
    """Physical VMEM per TensorCore; conservative fallback if the query fails."""
    try:
        info = pltpu.get_tpu_info()
        cap = getattr(info, "vmem_capacity_bytes", None)
        if cap:
            return int(cap)
    except Exception:
        pass
    return 64 * 1024 * 1024  # v7x-safe default


def _triplet_loss_kernel(a_ref, p_ref, n_ref, out_ref, *,
                         margin, normalized, n_rows, tile_n, mask_rows):
    # Upcast in-register (VPU); HBM traffic stays at the input dtype's width.
    a = a_ref[...].astype(jnp.float32)    # (TILE_N, D)
    p = p_ref[...].astype(jnp.float32)    # (TILE_N, D)
    ng = n_ref[...].astype(jnp.float32)   # (TILE_N, D)

    if normalized:
        # (a.n) - (a.p) + m  ==  a . (n - p) + m      (one mul, one reduce)
        loss = (jnp.sum(a * (ng - p), axis=1, keepdims=True)
                + jnp.float32(margin))                        # (TILE_N, 1)
    else:
        # (||a-p||^2 - ||a-n||^2 + 2m)/2  ==  0.5*(n-p).(2a-p-n) + m
        loss = (jnp.float32(0.5)
                * jnp.sum((ng - p) * (2.0 * a - p - ng), axis=1, keepdims=True)
                + jnp.float32(margin))

    # clamp: loss[loss <= 0] = 0  (also neutralizes NaN from undefined rows)
    loss = jnp.where(loss > 0.0, loss, 0.0)

    if mask_rows:
        # Overhang rows of the last (partial) block contain undefined data;
        # zero them via a global-row-index compare.
        row = (pl.program_id(0) * tile_n
               + jax.lax.broadcasted_iota(jnp.int32, loss.shape, 0))
        loss = jnp.where(row < n_rows, loss, 0.0)

    partial = jnp.sum(loss)                                   # cross-lane on XLU
    # Lane-dense (1, 8, 128) write: one unmasked vst per tile.
    out_ref[...] = jnp.full(out_ref.shape, partial, dtype=jnp.float32)


def triplet_loss(anchor, pos, neg, margin, size_average=True, normalized=True):
    """Pallas implementation of TripletLoss.forward. Returns shape (1,) f32."""
    n, d = anchor.shape
    itemsize = jnp.dtype(anchor.dtype).itemsize
    d_pad = _round_up(d, 128)  # lane padding the compiler applies per block row

    # --- tile selection -----------------------------------------------------
    vmem_cap = _vmem_capacity_bytes()
    # ~5/8 of physical VMEM (40 MiB on v7x's 64 MiB, 80 MiB on v5e/v6e's 128 MiB),
    # capped so we always leave compiler headroom.
    vmem_budget = min((vmem_cap * 5) // 8, 96 * 1024 * 1024)

    # Per-row VMEM footprint: 3 inputs x 2 pipeline buffers in the input dtype,
    # plus ~3 live f32 upcast intermediates in the kernel body.
    row_bytes = d_pad * (6 * itemsize + 3 * 4)
    tile_n = (vmem_budget // row_bytes // 8) * 8
    tile_n = max(8, min(4096, tile_n))
    # No point tiling past the (8-rounded) batch.
    tile_n = min(tile_n, _round_up(n, 8))
    # Megacore: keep at least 2 grid steps when N > 8 so a 2-TC chip (v7x)
    # shards the "parallel" axis across both TensorCores.
    tile_n = max(8, min(tile_n, _round_up(pl.cdiv(n, 2), 8)))

    num_tiles = pl.cdiv(n, tile_n)
    mask_rows = (n % tile_n) != 0

    # --- VMEM limit: pipeline buffers + f32 working set + headroom ----------
    block_in_bytes = tile_n * d_pad * itemsize
    block_f32_bytes = tile_n * d_pad * 4
    vmem_limit = int(6 * block_in_bytes + 4 * block_f32_bytes + (4 << 20))
    vmem_limit = min(vmem_limit, (vmem_cap * 7) // 8)

    # TODO(synk): if N varies at runtime, pass n_rows via scalar prefetch
    # (PrefetchScalarGridSpec) to avoid a Mosaic recompile per distinct N.
    kernel = functools.partial(
        _triplet_loss_kernel,
        margin=float(margin),
        normalized=bool(normalized),
        n_rows=n,
        tile_n=tile_n,
        mask_rows=mask_rows,
    )

    in_spec = pl.BlockSpec((tile_n, d), lambda i: (i, 0))
    partials = pl.pallas_call(
        kernel,
        out_shape=jax.ShapeDtypeStruct((num_tiles, 8, 128), jnp.float32),
        grid=(num_tiles,),
        in_specs=[in_spec, in_spec, in_spec],
        out_specs=pl.BlockSpec((1, 8, 128), lambda i: (i, 0, 0)),
        compiler_params=pltpu.CompilerParams(
            dimension_semantics=("parallel",),
            vmem_limit_bytes=vmem_limit,
        ),
    )(anchor, pos, neg)

    total = jnp.sum(partials[:, 0, 0])
    if size_average:
        total = total / jnp.float32(n)
    return total.reshape(1)


def triplet_loss_ref(anchor, pos, neg, margin, size_average=True, normalized=True):
    """Pure-JAX reference matching the PyTorch forward."""
    a = anchor.astype(jnp.float32)
    p = pos.astype(jnp.float32)
    ng = neg.astype(jnp.float32)
    if normalized:
        loss = jnp.sum(a * ng, axis=1) - jnp.sum(a * p, axis=1) + margin
    else:
        loss = (jnp.sum((a - p) ** 2, axis=1)
                - jnp.sum((a - ng) ** 2, axis=1) + 2.0 * margin) / 2.0
    loss = jnp.where(loss > 0.0, loss, 0.0)
    out = jnp.sum(loss).reshape(1)
    if size_average:
        out = out / anchor.shape[0]
    return out


if __name__ == "__main__":
    key = jax.random.PRNGKey(0)
    k1, k2, k3 = jax.random.split(key, 3)

    MARGIN = 0.2

    def check(a, p, ng, normalized, size_average=True):
        out = jax.block_until_ready(
            triplet_loss(a, p, ng, MARGIN,
                         size_average=size_average, normalized=normalized))
        ref = triplet_loss_ref(a, p, ng, MARGIN,
                               size_average=size_average, normalized=normalized)
        assert out.shape == (1,), out.shape
        assert jnp.allclose(out, ref, rtol=1e-5, atol=1e-5), (normalized, out, ref)

    # Case 1: small aligned batch (N divisible by 8), single tile.
    N, D = 8, 32
    a1 = jax.random.normal(k1, (N, D), dtype=jnp.float32)
    p1 = jax.random.normal(k2, (N, D), dtype=jnp.float32)
    n1 = jax.random.normal(k3, (N, D), dtype=jnp.float32)
    for normalized in (True, False):
        check(a1, p1, n1, normalized)

    # Case 2: ragged batch (exercises cdiv grid + in-kernel row masking, 2 tiles).
    N2 = 13
    a2 = jax.random.normal(k1, (N2, D), dtype=jnp.float32)
    p2 = jax.random.normal(k2, (N2, D), dtype=jnp.float32)
    n2 = jax.random.normal(k3, (N2, D), dtype=jnp.float32)
    for normalized in (True, False):
        check(a2, p2, n2, normalized)

    # Case 3: D not a multiple of 128, multiple tiles, partial last block.
    N3, D3 = 40, 160
    a3 = jax.random.normal(k1, (N3, D3), dtype=jnp.float32)
    p3 = jax.random.normal(k2, (N3, D3), dtype=jnp.float32)
    n3 = jax.random.normal(k3, (N3, D3), dtype=jnp.float32)
    for normalized in (True, False):
        check(a3, p3, n3, normalized, size_average=False)

    print("KERNEL_OK")
</pallas_src>

<mosaic_0001>
module attributes {stable_mosaic.version = 11 : i64} {
  func.func @_triplet_loss_kernel(%arg0: i32, %arg1: memref<8x32xf32, #tpu.memory_space<vmem>>, %arg2: memref<8x32xf32, #tpu.memory_space<vmem>>, %arg3: memref<8x32xf32, #tpu.memory_space<vmem>>, %arg4: memref<1x8x128xf32, #tpu.memory_space<vmem>>) attributes {dimension_semantics = [#tpu.dimension_semantics<parallel>], iteration_bounds = array<i64: 1>, scalar_prefetch = 0 : i64, scratch_operands = 0 : i64, tpu.core_type = #tpu.core_type<tc>, window_params = [{transform_indices = @transform_0, window_bounds = array<i64: 8, 32>}, {transform_indices = @transform_1, window_bounds = array<i64: 8, 32>}, {transform_indices = @transform_2, window_bounds = array<i64: 8, 32>}, {transform_indices = @transform_3, window_bounds = array<i64: 1, 8, 128>}]} {
    %c0 = arith.constant 0 : index
    %c0_0 = arith.constant 0 : index
    %0 = vector.load %arg1[%c0, %c0_0] : memref<8x32xf32, #tpu.memory_space<vmem>>, vector<8x32xf32>
    %c0_1 = arith.constant 0 : index
    %c0_2 = arith.constant 0 : index
    %1 = vector.load %arg2[%c0_1, %c0_2] : memref<8x32xf32, #tpu.memory_space<vmem>>, vector<8x32xf32>
    %c0_3 = arith.constant 0 : index
    %c0_4 = arith.constant 0 : index
    %2 = vector.load %arg3[%c0_3, %c0_4] : memref<8x32xf32, #tpu.memory_space<vmem>>, vector<8x32xf32>
    %3 = arith.subf %2, %1 : vector<8x32xf32>
    %4 = arith.mulf %0, %3 : vector<8x32xf32>
    %cst = arith.constant dense<0.000000e+00> : vector<8xf32>
    %5 = vector.multi_reduction <add>, %4, %cst [1] : vector<8x32xf32> to vector<8xf32>
    %6 = vector.shape_cast %5 : vector<8xf32> to vector<8x1xf32>
    %cst_5 = arith.constant 2.000000e-01 : f32
    %7 = vector.broadcast %cst_5 : f32 to vector<8x1xf32>
    %8 = arith.addf %6, %7 : vector<8x1xf32>
    %cst_6 = arith.constant 0.000000e+00 : f32
    %9 = vector.broadcast %cst_6 : f32 to vector<8x1xf32>
    %10 = arith.cmpf ogt, %8, %9 : vector<8x1xf32>
    %cst_7 = arith.constant 0.000000e+00 : f32
    %11 = vector.broadcast %cst_7 : f32 to vector<8x1xf32>
    %12 = arith.select %10, %8, %11 : vector<8x1xi1>, vector<8x1xf32>
    %13 = vector.shape_cast %12 : vector<8x1xf32> to vector<1x8x1xf32>
    %cst_8 = arith.constant dense<0.000000e+00> : vector<1xf32>
    %14 = vector.multi_reduction <add>, %13, %cst_8 [1, 2] : vector<1x8x1xf32> to vector<1xf32>
    %15 = vector.shape_cast %14 : vector<1xf32> to vector<1x1x1xf32>
    %16 = vector.extract %15[0, 0, 0] : f32 from vector<1x1x1xf32>
    %17 = vector.broadcast %16 : f32 to vector<1x8x128xf32>
    %c0_9 = arith.constant 0 : index
    %c0_10 = arith.constant 0 : index
    %c0_11 = arith.constant 0 : index
    %18 = vector.load %arg4[%c0_9, %c0_10, %c0_11] : memref<1x8x128xf32, #tpu.memory_space<vmem>>, vector<1x8x128xf32>
    tpu.vector_store %arg4[%c0_9, %c0_10, %c0_11], %17 {strides = array<i32>} : memref<1x8x128xf32, #tpu.memory_space<vmem>>, vector<1x8x128xf32>,
    return
  }
  func.func @transform_0(%arg0: i32) -> (i32, i32) {
    %c0_i32 = arith.constant 0 : i32
    %c0_i32_0 = arith.constant 0 : i32
    return %arg0, %c0_i32 : i32, i32
  }
  func.func @transform_1(%arg0: i32) -> (i32, i32) {
    %c0_i32 = arith.constant 0 : i32
    %c0_i32_0 = arith.constant 0 : i32
    return %arg0, %c0_i32 : i32, i32
  }
  func.func @transform_2(%arg0: i32) -> (i32, i32) {
    %c0_i32 = arith.constant 0 : i32
    %c0_i32_0 = arith.constant 0 : i32
    return %arg0, %c0_i32 : i32, i32
  }
  func.func @transform_3(%arg0: i32) -> (i32, i32, i32) {
    %c0_i32 = arith.constant 0 : i32
    %c0_i32_0 = arith.constant 0 : i32
    %c0_i32_1 = arith.constant 0 : i32
    return %arg0, %c0_i32, %c0_i32_0 : i32, i32, i32
  }
}

</mosaic_0001>

<llo_original>
// kernel: tpu_custom_call.1
$region0: #{tpu_custom_call.1}
  #allocation0 [shape = 'u32[]', space=smem, size = 0x4, offset = 0x4, fixed_abs, tag = 'smem constant byte address 0x4 - core index']
  #allocation1 [shape = 'u32[144,128]{1,0:T(1,128)}', space=vmem, size = 0x12000, scoped, tag = 'internal scratch']
  %s0 = inlined_call_operand.hbm [shape: f32[8,32], index: 0, kind: input, shape index: {}]
  %s1 = inlined_call_operand.hbm [shape: f32[8,32], index: 1, kind: input, shape index: {}]
  %s2 = inlined_call_operand.hbm [shape: f32[8,32], index: 2, kind: input, shape index: {}]
  %s3 = inlined_call_operand.hbm [shape: f32[1,8,128], index: 3, kind: output, shape index: {}]
  %s4 = sld [smem:[#allocation0]]
  $region34: #{tpu_custom_call.1} parent=0
    _
  %s6 = ssub.s32 1, %s4
  %s7 = scalar_select 0, %s6, %s4
  $region1: #{tpu_custom_call.1} parent=0
    #allocation2 [shape = 'u8[4096]{0}', space=vmem, size = 0x1000, scoped, tag = 'input window, operand 0, single buffered']
    #allocation3 [shape = 's32[1]{0}', space=sflag, size = 0x4, scoped, tag = 'scoped memory for tpu_custom_call.1']
    #allocation4 [shape = 's32[1]{0}', space=sflag, size = 0x4, scoped, tag = 'scoped memory for tpu_custom_call.1']
    #allocation5 [shape = 'u8[4096]{0}', space=vmem, size = 0x1000, scoped, tag = 'input window, operand 1, single buffered']
    #allocation6 [shape = 's32[1]{0}', space=sflag, size = 0x4, scoped, tag = 'scoped memory for tpu_custom_call.1']
    #allocation7 [shape = 'u8[4096]{0}', space=vmem, size = 0x1000, scoped, tag = 'input window, operand 2, single buffered']
    #allocation8 [shape = 'u8[4096]{0}', space=vmem, size = 0x1000, scoped, tag = 'output window, operand 0, single buffered']
    %8 = vsyncpa [#allocation3], 0
    %9 = vsyncpa [#allocation6], 0
    %10 = vsyncpa [#allocation4], 0
    // Predicated region
    $region2: #{tpu_custom_call.1} parent=1 // pred_check
      _
    $region3: #{tpu_custom_call.1} parent=1 // pred_check_branch
      %12 = sbr.rel (0) target = $region5
    $region4: #{tpu_custom_call.1} parent=1 // pred_region
      %s14 = ssub.s32 128, 128
      %15 = vsyncadd [#allocation3], %s14
      %s17 = sshll.u32 [#allocation2], 4
      %s18 = int_to_ptr.vmem [resolvable:$true] %s17
      %20 = dma.hbm_to_vmem [thread:$0]  %s0, 128, %s18, [#allocation3]
    $region5: #{tpu_custom_call.1} parent=1 // pred_fallthru
      _
    // Predicated region
    $region6: #{tpu_custom_call.1} parent=1 // pred_check
      _
    $region7: #{tpu_custom_call.1} parent=1 // pred_check_branch
      %22 = sbr.rel (0) target = $region9
    $region8: #{tpu_custom_call.1} parent=1 // pred_region
      %s24 = ssub.s32 128, 128
      %25 = vsyncadd [#allocation6], %s24
      %s27 = sshll.u32 [#allocation5], 4
      %s28 = int_to_ptr.vmem [resolvable:$true] %s27
      %30 = dma.hbm_to_vmem [thread:$0]  %s1, 128, %s28, [#allocation6]
    $region9: #{tpu_custom_call.1} parent=1 // pred_fallthru
      _
    // Predicated region
    $region10: #{tpu_custom_call.1} parent=1 // pred_check
      _
    $region11: #{tpu_custom_call.1} parent=1 // pred_check_branch
      %32 = sbr.rel (0) target = $region13
    $region12: #{tpu_custom_call.1} parent=1 // pred_region
      %s34 = ssub.s32 128, 128
      %35 = vsyncadd [#allocation6], %s34
      %s37 = sshll.u32 [#allocation7], 4
      %s38 = int_to_ptr.vmem [resolvable:$true] %s37
      %40 = dma.hbm_to_vmem [thread:$0]  %s2, 128, %s38, [#allocation6]
    $region13: #{tpu_custom_call.1} parent=1 // pred_fallthru
      _
    // Predicated region
    $region14: #{tpu_custom_call.1} parent=1 // pred_check
      _
    $region15: #{tpu_custom_call.1} parent=1 // pred_check_branch
      %42 = sbr.rel (0) target = $region17
    $region16: #{tpu_custom_call.1} parent=1 // pred_region
      %43 = dma.done [#allocation3], 128
    $region17: #{tpu_custom_call.1} parent=1 // pred_fallthru
      _
    // Predicated region
    $region18: #{tpu_custom_call.1} parent=1 // pred_check
      _
    $region19: #{tpu_custom_call.1} parent=1 // pred_check_branch
      %45 = sbr.rel (0) target = $region21
    $region20: #{tpu_custom_call.1} parent=1 // pred_region
      %46 = dma.done [#allocation6], 128
    $region21: #{tpu_custom_call.1} parent=1 // pred_fallthru
      _
    // Predicated region
    $region22: #{tpu_custom_call.1} parent=1 // pred_check
      _
    $region23: #{tpu_custom_call.1} parent=1 // pred_check_branch
      %48 = sbr.rel (0) target = $region25
    $region24: #{tpu_custom_call.1} parent=1 // pred_region
      %49 = dma.done [#allocation6], 128
    $region25: #{tpu_custom_call.1} parent=1 // pred_fallthru
      _
    %v50 = vld [vmem:[#allocation2] sm:$0xff]
    %v51 = vld [vmem:[#allocation5] sm:$0xff]
    %v52 = vld [vmem:[#allocation7] sm:$0xff]
    %v53 = vsub.f32 %v52, %v51
    %v54 = vmul.f32 %v50, %v53
    %vm55 = vcmask 261120
    %v56 = vsel %vm55, %v54, 0.0
    %57 = vadd.xlane.f32.xlu0 %v56
    %v58 = vpop.xlane.xlu0 %57
    %v59 = vadd.f32 %v58, 0.2
    %vm60 = vcmp.gt.f32.partialorder %v59, 0.0
    %v61 = vsel %vm60, %v59, 0.0
    %vm62 = vcmask 7168
    %v63 = vsel %vm62, %v61, 0.0
    %64 = vadd.xlane.f32.xlu0 %v63
    %v65 = vpop.xlane.xlu0 %64
    %v66 = vrot.slane %v65, 4
    %v67 = vadd.f32 %v65, %v66
    %v68 = vrot.slane %v67, 2
    %v69 = vadd.f32 %v67, %v68
    %v70 = vrot.slane %v69, 1
    %v71 = vadd.f32 %v69, %v70
    %s72 = vtos %v71
    %v73 = vstv %s72
    %74 = vst [vmem:[#allocation8] sm:$0xff] %v73
    // Predicated region
    $region26: #{tpu_custom_call.1} parent=1 // pred_check
      _
    $region27: #{tpu_custom_call.1} parent=1 // pred_check_branch
      %76 = sbr.rel (0) target = $region29
    $region28: #{tpu_custom_call.1} parent=1 // pred_region
      %s78 = ssub.s32 128, 128
      %79 = vsyncadd [#allocation4], %s78
      %s81 = sshll.u32 [#allocation8], 4
      %s82 = int_to_ptr.vmem [resolvable:$true] %s81
      %84 = dma.vmem_to_hbm [thread:$0]  %s82, 128, %s3, [#allocation4]
    $region29: #{tpu_custom_call.1} parent=1 // pred_fallthru
      _
    // Predicated region
    $region30: #{tpu_custom_call.1} parent=1 // pred_check
      _
    $region31: #{tpu_custom_call.1} parent=1 // pred_check_branch
      %86 = sbr.rel (0) target = $region33
    $region32: #{tpu_custom_call.1} parent=1 // pred_region
      %87 = dma.done [#allocation4], 128
    $region33: #{tpu_custom_call.1} parent=1 // pred_fallthru
      _
    %88 = vsyncpa [#allocation3], 1
    %89 = vsyncpa [#allocation6], 1
    %90 = vsyncpa [#allocation4], 1

</llo_original>
